<compile_context>
chip_gen: v5e
topology: v5e:2x2
jax: 0.10.0
libtpu: 0.0.40
codegen_flags: <defaults>
</compile_context>

<pallas_src>
import functools

import jax
import jax.numpy as jnp
from jax.experimental import pallas as pl
from jax.experimental.pallas import tpu as pltpu


def se_kernel(x_ref, w1t_ref, w2t_ref, o_ref, *, inv_hw):
    xv = x_ref[...]                                            # (Bt, C, HWp)
    # ---- squeeze: padded lanes are zero; sum over lanes, scale by 1/true_HW ----
    y = jnp.sum(xv.astype(jnp.float32), axis=-1) * inv_hw      # (Bt, C)  f32
    # ---- excitation (f32): fc1 -> ReLU -> fc2 -> sigmoid ----
    h = jnp.dot(y, w1t_ref[...], preferred_element_type=jnp.float32)   # (Bt, Cr)
    h = jnp.maximum(h, 0.0)
    s = jnp.dot(h, w2t_ref[...], preferred_element_type=jnp.float32)   # (Bt, C)
    s = jax.nn.sigmoid(s)
    # ---- scale: cast gate once, multiply + store in the I/O dtype ----
    gate = s.astype(o_ref.dtype)
    o_ref[...] = xv.astype(o_ref.dtype) * gate[:, :, None]


def _pick_block_b(B, C, HW_pad, itemsize, budget_bytes=40 << 20):
    """Largest Bt dividing B whose 2-in + 2-out pipelined slabs fit the budget;
    back off to grid >= 2 (v7x: feed both TensorCores) only if each step still
    moves >= 1 MiB. Very large single-image slabs simply use Bt=1."""
    per_img = C * HW_pad * itemsize
    bt = 1
    for d in range(1, B + 1):
        if B % d == 0 and 4 * d * per_img <= budget_bytes:
            bt = d
    if B // bt < 2:
        for d in range(bt, 0, -1):
            if B % d == 0 and B // d >= 2 and d * per_img >= (1 << 20):
                bt = d
                break
    return bt


def se_block(x, w1, w2):
    B, C, H, W = x.shape
    HW = H * W
    Cr = w1.shape[0]
    itemsize = jnp.dtype(x.dtype).itemsize

    # Lane-dense spatial axis: pad HW up to a multiple of 128 with zeros.
    HW_pad = pl.cdiv(HW, 128) * 128
    xf = x.reshape(B, C, HW)
    if HW_pad != HW:
        xf = jnp.pad(xf, ((0, 0), (0, 0), (0, HW_pad - HW)))

    Bt = _pick_block_b(B, C, HW_pad, itemsize)
    grid = (B // Bt,)

    # VMEM budget: double-buffered input + output slabs, weights, slack.
    block_bytes = Bt * C * HW_pad * itemsize
    weight_bytes = 2 * C * Cr * 4
    needed = 4 * block_bytes + 4 * weight_bytes + (2 << 20)
    vmem_limit = int(min(112 << 20, max(32 << 20, needed)))

    kernel = functools.partial(se_kernel, inv_hw=float(1.0 / HW))

    cost = pl.CostEstimate(
        flops=int(2 * B * C * HW + 4 * B * C * Cr),
        transcendentals=int(B * C),
        bytes_accessed=int(2 * B * C * HW_pad * itemsize),
    )

    out = pl.pallas_call(
        kernel,
        out_shape=jax.ShapeDtypeStruct((B, C, HW_pad), x.dtype),
        grid_spec=pltpu.PrefetchScalarGridSpec(
            num_scalar_prefetch=0,
            grid=grid,
            in_specs=[
                pl.BlockSpec((Bt, C, HW_pad), lambda b: (b, 0, 0)),
                pl.BlockSpec((C, Cr), lambda b: (0, 0)),
                pl.BlockSpec((Cr, C), lambda b: (0, 0)),
            ],
            out_specs=pl.BlockSpec((Bt, C, HW_pad), lambda b: (b, 0, 0)),
        ),
        compiler_params=pltpu.CompilerParams(
            dimension_semantics=("parallel",),
            vmem_limit_bytes=vmem_limit,
        ),
        cost_estimate=cost,
    )(xf, jnp.transpose(w1), jnp.transpose(w2))

    if HW_pad != HW:
        out = out[:, :, :HW]
    return out.reshape(B, C, H, W)


def se_reference(x, w1, w2):
    # Pure-JAX reference mirroring the PyTorch module (f32).
    y = jnp.mean(x, axis=(2, 3))                    # (B, C)
    y = jnp.maximum(y @ w1.T, 0.0)                  # (B, C//r)
    y = jax.nn.sigmoid(y @ w2.T)                    # (B, C)
    return x * y[:, :, None, None]


if __name__ == "__main__":
    key = jax.random.PRNGKey(0)
    kx, k1, k2, kx2 = jax.random.split(key, 4)

    # channels=32, reduction=16 -> hidden=2
    B, C, H, W = 2, 32, 16, 16
    reduction = 16
    Cr = C // reduction

    x = jax.random.normal(kx, (B, C, H, W), dtype=jnp.float32)
    w1 = jax.random.normal(k1, (Cr, C), dtype=jnp.float32) * (1.0 / jnp.sqrt(C))
    w2 = jax.random.normal(k2, (C, Cr), dtype=jnp.float32) * (1.0 / jnp.sqrt(Cr))

    # f32, lane-dense spatial (16x16 = 256).
    out = jax.block_until_ready(se_block(x, w1, w2))
    ref = se_reference(x, w1, w2)
    assert out.shape == (B, C, H, W)
    assert jnp.allclose(out, ref, atol=1e-4, rtol=1e-4)

    # f32, non-lane-dense spatial (7x7 = 49): exercises pad + masked-mean path.
    x2 = jax.random.normal(kx2, (3, C, 7, 7), dtype=jnp.float32)
    out2 = jax.block_until_ready(se_block(x2, w1, w2))
    ref2 = se_reference(x2, w1, w2)
    assert out2.shape == x2.shape
    assert jnp.allclose(out2, ref2, atol=1e-4, rtol=1e-4)

    # bf16 I/O path (f32 accumulation inside the kernel).
    xb = x.astype(jnp.bfloat16)
    outb = jax.block_until_ready(se_block(xb, w1, w2))
    refb = se_reference(xb.astype(jnp.float32), w1, w2)
    assert outb.dtype == jnp.bfloat16
    assert jnp.allclose(outb.astype(jnp.float32), refb, atol=6e-2, rtol=6e-2)

    print("KERNEL_OK")
</pallas_src>

<mosaic_0001>
module attributes {stable_mosaic.version = 11 : i64} {
  func.func @se_kernel(%arg0: i32, %arg1: memref<2x32x256xf32, #tpu.memory_space<vmem>>, %arg2: memref<32x2xf32, #tpu.memory_space<vmem>>, %arg3: memref<2x32xf32, #tpu.memory_space<vmem>>, %arg4: memref<2x32x256xf32, #tpu.memory_space<vmem>>) attributes {dimension_semantics = [#tpu.dimension_semantics<parallel>], iteration_bounds = array<i64: 1>, scalar_prefetch = 0 : i64, scratch_operands = 0 : i64, tpu.core_type = #tpu.core_type<tc>, window_params = [{transform_indices = @transform_0, window_bounds = array<i64: 2, 32, 256>}, {pipeline_mode = #tpu.pipeline_mode<synchronous>, transform_indices = @transform_1, window_bounds = array<i64: 32, 2>}, {pipeline_mode = #tpu.pipeline_mode<synchronous>, transform_indices = @transform_2, window_bounds = array<i64: 2, 32>}, {transform_indices = @transform_3, window_bounds = array<i64: 2, 32, 256>}]} {
    %c0 = arith.constant 0 : index
    %c0_0 = arith.constant 0 : index
    %c0_1 = arith.constant 0 : index
    %0 = vector.load %arg1[%c0, %c0_0, %c0_1] : memref<2x32x256xf32, #tpu.memory_space<vmem>>, vector<2x32x256xf32>
    %cst = arith.constant dense<0.000000e+00> : vector<2x32xf32>
    %1 = vector.multi_reduction <add>, %0, %cst [2] : vector<2x32x256xf32> to vector<2x32xf32>
    %cst_2 = arith.constant 3.906250e-03 : f32
    %2 = vector.broadcast %cst_2 : f32 to vector<2x32xf32>
    %3 = arith.mulf %1, %2 : vector<2x32xf32>
    %c0_3 = arith.constant 0 : index
    %c0_4 = arith.constant 0 : index
    %4 = vector.load %arg2[%c0_3, %c0_4] : memref<32x2xf32, #tpu.memory_space<vmem>>, vector<32x2xf32>
    %cst_5 = arith.constant dense<0.000000e+00> : vector<2x2xf32>
    %5 = tpu.matmul %3, %4, %cst_5 {dimension_numbers = #tpu.dot_dimension_numbers<[1], [0], [0], [1], [0, 0, 1, 1], [], []>} : vector<2x32xf32>, vector<32x2xf32>, vector<2x2xf32> -> vector<2x2xf32>
    %cst_6 = arith.constant 0.000000e+00 : f32
    %6 = vector.broadcast %cst_6 : f32 to vector<2x2xf32>
    %7 = arith.maximumf %5, %6 : vector<2x2xf32>
    %c0_7 = arith.constant 0 : index
    %c0_8 = arith.constant 0 : index
    %8 = vector.load %arg3[%c0_7, %c0_8] : memref<2x32xf32, #tpu.memory_space<vmem>>, vector<2x32xf32>
    %cst_9 = arith.constant dense<0.000000e+00> : vector<2x32xf32>
    %9 = tpu.matmul %7, %8, %cst_9 {dimension_numbers = #tpu.dot_dimension_numbers<[1], [0], [0], [1], [0, 0, 1, 1], [], []>} : vector<2x2xf32>, vector<2x32xf32>, vector<2x32xf32> -> vector<2x32xf32>
    %10 = arith.negf %9 : vector<2x32xf32>
    %11 = math.exp %10 : vector<2x32xf32>
    %cst_10 = arith.constant 1.000000e+00 : f32
    %12 = vector.broadcast %cst_10 : f32 to vector<2x32xf32>
    %13 = arith.addf %12, %11 : vector<2x32xf32>
    %14 = arith.divf %12, %13 : vector<2x32xf32>
    %15 = vector.shape_cast %14 : vector<2x32xf32> to vector<2x32x1xf32>
    %16 = vector.broadcast %15 : vector<2x32x1xf32> to vector<2x32x256xf32>
    %17 = arith.mulf %0, %16 : vector<2x32x256xf32>
    %c0_11 = arith.constant 0 : index
    %c0_12 = arith.constant 0 : index
    %c0_13 = arith.constant 0 : index
    %18 = vector.load %arg4[%c0_11, %c0_12, %c0_13] : memref<2x32x256xf32, #tpu.memory_space<vmem>>, vector<2x32x256xf32>
    tpu.vector_store %arg4[%c0_11, %c0_12, %c0_13], %17 {strides = array<i32>} : memref<2x32x256xf32, #tpu.memory_space<vmem>>, vector<2x32x256xf32>,
    return
  }
  func.func @transform_0(%arg0: i32) -> (i32, i32, i32) {
    %c0_i32 = arith.constant 0 : i32
    %c0_i32_0 = arith.constant 0 : i32
    %c0_i32_1 = arith.constant 0 : i32
    return %arg0, %c0_i32, %c0_i32_0 : i32, i32, i32
  }
  func.func @transform_1(%arg0: i32) -> (i32, i32) {
    %c0_i32 = arith.constant 0 : i32
    %c0_i32_0 = arith.constant 0 : i32
    %c0_i32_1 = arith.constant 0 : i32
    return %c0_i32, %c0_i32_0 : i32, i32
  }
  func.func @transform_2(%arg0: i32) -> (i32, i32) {
    %c0_i32 = arith.constant 0 : i32
    %c0_i32_0 = arith.constant 0 : i32
    %c0_i32_1 = arith.constant 0 : i32
    return %c0_i32, %c0_i32_0 : i32, i32
  }
  func.func @transform_3(%arg0: i32) -> (i32, i32, i32) {
    %c0_i32 = arith.constant 0 : i32
    %c0_i32_0 = arith.constant 0 : i32
    %c0_i32_1 = arith.constant 0 : i32
    return %arg0, %c0_i32, %c0_i32_0 : i32, i32, i32
  }
}

</mosaic_0001>

<llo_original>
// kernel: tpu_custom_call.1
$region0: #{tpu_custom_call.1}
  #allocation0 [shape = 'u32[]', space=smem, size = 0x4, offset = 0x4, fixed_abs, tag = 'smem constant byte address 0x4 - core index']
  #allocation1 [shape = 'u32[72,128]{1,0:T(1,128)}', space=vmem, size = 0x9000, scoped, tag = 'internal scratch']
  %s0 = inlined_call_operand.hbm [shape: f32[2,32,256], index: 0, kind: input, shape index: {}]
  %s1 = inlined_call_operand.vmem [shape: f32[32,2], index: 1, kind: input, shape index: {}]
  %s2 = inlined_call_operand.vmem [shape: f32[2,32], index: 2, kind: input, shape index: {}]
  %s3 = inlined_call_operand.hbm [shape: f32[2,32,256], index: 3, kind: output, shape index: {}]
  %s4 = sld [smem:[#allocation0]]
  $region26: #{tpu_custom_call.1} parent=0
    _
  %s6 = ssub.s32 1, %s4
  %s7 = scalar_select 0, %s6, %s4
  $region1: #{tpu_custom_call.1} parent=0
    #allocation2 [shape = 'u8[65536]{0}', space=vmem, size = 0x10000, scoped, tag = 'input window, operand 0, single buffered']
    #allocation3 [shape = 's32[1]{0}', space=sflag, size = 0x4, scoped, tag = 'scoped memory for tpu_custom_call.1']
    #allocation4 [shape = 's32[1]{0}', space=sflag, size = 0x4, scoped, tag = 'scoped memory for tpu_custom_call.1']
    #allocation5 [shape = 'u8[65536]{0}', space=vmem, size = 0x10000, scoped, tag = 'output window, operand 0, single buffered']
    %8 = vsyncpa [#allocation3], 0
    %9 = vsyncpa [#allocation4], 0
    // Predicated region
    $region2: #{tpu_custom_call.1} parent=1 // pred_check
      _
    $region3: #{tpu_custom_call.1} parent=1 // pred_check_branch
      %11 = sbr.rel (0) target = $region5
    $region4: #{tpu_custom_call.1} parent=1 // pred_region
      %13 = vsyncadd [#allocation3], 0
      %s14 = sshll.u32 %s0, 4
      %s15 = int_to_ptr.hbm [resolvable:$true] %s14
      %s16 = sshll.u32 [#allocation2], 4
      %s17 = int_to_ptr.vmem [resolvable:$true] %s16
      %22 = dma.hbm_to_vmem [thread:$0]  %s15, 2048, %s17, [#allocation3], 256, 256, 16
    $region5: #{tpu_custom_call.1} parent=1 // pred_fallthru
      _
    // Predicated region
    $region6: #{tpu_custom_call.1} parent=1 // pred_check
      _
    $region7: #{tpu_custom_call.1} parent=1 // pred_check_branch
      %24 = sbr.rel (0) target = $region9
    $region8: #{tpu_custom_call.1} parent=1 // pred_region
      _
    $region9: #{tpu_custom_call.1} parent=1 // pred_fallthru
      _
    // Predicated region
    $region10: #{tpu_custom_call.1} parent=1 // pred_check
      _
    $region11: #{tpu_custom_call.1} parent=1 // pred_check_branch
      %26 = sbr.rel (0) target = $region13
    $region12: #{tpu_custom_call.1} parent=1 // pred_region
      _
    $region13: #{tpu_custom_call.1} parent=1 // pred_fallthru
      _
    // Predicated region
    $region14: #{tpu_custom_call.1} parent=1 // pred_check
      _
    $region15: #{tpu_custom_call.1} parent=1 // pred_check_branch
      %28 = sbr.rel (0) target = $region17
    $region16: #{tpu_custom_call.1} parent=1 // pred_region
      %30 = dma.done [#allocation3], 2048
    $region17: #{tpu_custom_call.1} parent=1 // pred_fallthru
      _
    %v31 = vld [vmem:[#allocation2] sm:$0xff]
    %v32 = vld [vmem:[#allocation2 + $0x8] sm:$0xff]
    %v33 = vld [vmem:[#allocation2 + $0x10] sm:$0xff]
    %v34 = vld [vmem:[#allocation2 + $0x18] sm:$0xff]
    %v35 = vld [vmem:[#allocation2 + $0x20] sm:$0xff]
    %v36 = vld [vmem:[#allocation2 + $0x28] sm:$0xff]
    %v37 = vld [vmem:[#allocation2 + $0x30] sm:$0xff]
    %v38 = vld [vmem:[#allocation2 + $0x38] sm:$0xff]
    %v39 = vld [vmem:[#allocation2 + $0x40] sm:$0xff]
    %v40 = vld [vmem:[#allocation2 + $0x48] sm:$0xff]
    %v41 = vld [vmem:[#allocation2 + $0x50] sm:$0xff]
    %v42 = vld [vmem:[#allocation2 + $0x58] sm:$0xff]
    %v43 = vld [vmem:[#allocation2 + $0x60] sm:$0xff]
    %v44 = vld [vmem:[#allocation2 + $0x68] sm:$0xff]
    %v45 = vld [vmem:[#allocation2 + $0x70] sm:$0xff]
    %v46 = vld [vmem:[#allocation2 + $0x78] sm:$0xff]
    %v47 = vadd.f32 %v31, %v32
    %48 = vadd.xlane.f32.xlu0 %v47
    %v49 = vpop.xlane.xlu0 %48
    %v50 = vadd.f32 %v33, %v34
    %51 = vadd.xlane.f32.xlu0 %v50
    %v52 = vpop.xlane.xlu0 %51
    %v53 = vadd.f32 %v35, %v36
    %54 = vadd.xlane.f32.xlu0 %v53
    %v55 = vpop.xlane.xlu0 %54
    %v56 = vadd.f32 %v37, %v38
    %57 = vadd.xlane.f32.xlu0 %v56
    %v58 = vpop.xlane.xlu0 %57
    %v59 = vadd.f32 %v39, %v40
    %60 = vadd.xlane.f32.xlu0 %v59
    %v61 = vpop.xlane.xlu0 %60
    %v62 = vadd.f32 %v41, %v42
    %63 = vadd.xlane.f32.xlu0 %v62
    %v64 = vpop.xlane.xlu0 %63
    %v65 = vadd.f32 %v43, %v44
    %66 = vadd.xlane.f32.xlu0 %v65
    %v67 = vpop.xlane.xlu0 %66
    %v68 = vadd.f32 %v45, %v46
    %69 = vadd.xlane.f32.xlu0 %v68
    %v70 = vpop.xlane.xlu0 %69
    %v71 = vmul.f32 %v49, 0.00390625
    %v72 = vmul.f32 %v52, 0.00390625
    %v73 = vmul.f32 %v55, 0.00390625
    %v74 = vmul.f32 %v58, 0.00390625
    %v75 = vmul.f32 %v61, 0.00390625
    %v76 = vmul.f32 %v64, 0.00390625
    %v77 = vmul.f32 %v67, 0.00390625
    %v78 = vmul.f32 %v70, 0.00390625
    %v79 = vld [vmem:[%s1] sm:$0xff]
    %v80 = vld [vmem:[%s1 + $0x8] sm:$0xff]
    %v81 = vld [vmem:[%s1 + $0x10] sm:$0xff]
    %v82 = vld [vmem:[%s1 + $0x18] sm:$0xff]
    %v91 = vlaneseq
    %v92 = vand.u32 %v91, 127
    %v93 = vperm.slane %v71, %v92
    %v94 = vadd.s32 %v92, 4294967288
    %v95 = vperm.slane %v72, %v94
    %vm96 = vcmask 130112
    %v97 = vsel %vm96, %v95, %v93
    %v98 = vadd.s32 %v92, 4294967280
    %v99 = vperm.slane %v73, %v98
    %vm100 = vcmask 195712
    %v101 = vsel %vm100, %v99, %v97
    %v102 = vadd.s32 %v92, 4294967272
    %v103 = vperm.slane %v74, %v102
    %vm104 = vcmask 261312
    %v105 = vsel %vm104, %v103, %v101
    %v106 = vperm.slane %v75, %v92
    %v107 = vperm.slane %v76, %v94
    %v108 = vsel %vm96, %v107, %v106
    %v109 = vperm.slane %v77, %v98
    %v110 = vsel %vm100, %v109, %v108
    %v111 = vperm.slane %v78, %v102
    %v112 = vsel %vm104, %v111, %v110
    %vm113 = vcmask 1041409
    %v114 = vsel %vm113, %v112, %v105
    %vm115 = vcmask 261120
    %v116 = vsel %vm115, %v114, 0
    %118 = vmatpush.msra.mxu0 0.0
    %119 = vmatpush.msra.mxu0 0.0
    %120 = vmatpush.msra.mxu0 0.0
    %121 = vmatpush.msra.mxu0 0.0
    %122 = vmatpush.msra.mxu0 0.0
    %123 = vmatpush.msra.mxu0 0.0
    %124 = vmatpush.msra.mxu0 0.0
    %125 = vmatpush.msra.mxu0 0.0
    %126 = vmatpush.msra.mxu0 0.0
    %127 = vmatpush.msra.mxu0 0.0
    %128 = vmatpush.msra.mxu0 0.0
    %129 = vmatpush.msra.mxu0 0.0
    %130 = vmatpush.msra.mxu0 %v82
    %131 = vmatpush.msra.mxu0 %v81
    %132 = vmatpush.msra.mxu0 %v80
    %133 = vmatpush.msra.mxu0 %v79
    %134 = vmatmul.f32.gmra.mxu0 %v116
    %v135 = vpop.f32.mrf.mxu0
    %v136 = vadd.f32 0.0, %v135
    %137 = vdwg.mxu0
    %v138 = vmax.f32 %v136, 0.0
    %v139 = vld [vmem:[%s2] sm:$0x3]
    %vm140 = vcmask 15360
    %v142 = vsel %vm140, %v138, 0
    %vm144 = vcmask 1041408
    %v146 = vsel %vm144, %v139, 0
    %148 = vmatpush.msra.mxu0 0.0
    %149 = vmatpush.msra.mxu0 0.0
    %150 = vmatpush.msra.mxu0 0.0
    %151 = vmatpush.msra.mxu0 0.0
    %152 = vmatpush.msra.mxu0 0.0
    %153 = vmatpush.msra.mxu0 0.0
    %154 = vmatpush.msra.mxu0 0.0
    %155 = vmatpush.msra.mxu0 0.0
    %156 = vmatpush.msra.mxu0 0.0
    %157 = vmatpush.msra.mxu0 0.0
    %158 = vmatpush.msra.mxu0 0.0
    %159 = vmatpush.msra.mxu0 0.0
    %160 = vmatpush.msra.mxu0 0.0
    %161 = vmatpush.msra.mxu0 0.0
    %162 = vmatpush.msra.mxu0 0.0
    %163 = vmatpush.msra.mxu0 %v146
    %164 = vmatmul.f32.gmra.mxu0 %v142
    %v165 = vpop.f32.mrf.mxu0
    %v166 = vadd.f32 0.0, %v165
    %167 = vdwg.mxu0
    %v168 = vxor.u32 %v166, 2147483648
    %v169 = vmul.f32 %v168, 1.442695
    %v170 = vpow.pop %v169
    %v171 = vadd.f32 %v170, 1.0
    %v172 = vrcp.pop %v171
    %v173 = vmul.f32 %v171, %v172
    %v174 = vsub.f32 1.0, %v173
    %v175 = vmul.f32 %v172, %v174
    %v176 = vadd.f32 %v172, %v175
    %vm177 = vweird.f32 %v171
    %vm178 = vweird.f32 %v172
    %vm179 = vmor %vm177, %vm178
    %v180 = vsel %vm179, %v172, %v176
    %v181 = vand.u32 2147483647, %v171
    %vm182 = vcmp.eq.f32.partialorder %v181, 8.507059e+37
    %v183 = vand.u32 %v171, 2147483648
    %v184 = vor.u32 1.1754944e-38, %v183
    %v185 = vsel %vm182, %v184, %v180
    %v186 = vmul.f32 1.0, %v185
    %v187 = vperm.slane %v186, 0
    %v188 = vlaneseq
    %v189 = vshrl.u32 %v188, 7
    %191 = vset.pattern.permute.xlu0 %v189
    %192 = vperm.xlu0 %191, %v187
    %v193 = vpop.permute.xlu0 %192
    %v194 = vlaneseq
    %v195 = vshrl.u32 %v194, 7
    %v196 = vadd.s32 %v195, 8
    %197 = vset.pattern.permute.xlu0 %v196
    %198 = vperm.xlu0 %197, %v187
    %v199 = vpop.permute.xlu0 %198
    %v200 = vlaneseq
    %v201 = vshrl.u32 %v200, 7
    %v202 = vadd.s32 %v201, 16
    %203 = vset.pattern.permute.xlu0 %v202
    %204 = vperm.xlu0 %203, %v187
    %v205 = vpop.permute.xlu0 %204
    %v206 = vlaneseq
    %v207 = vshrl.u32 %v206, 7
    %v208 = vadd.s32 %v207, 24
    %209 = vset.pattern.permute.xlu0 %v208
    %210 = vperm.xlu0 %209, %v187
    %v211 = vpop.permute.xlu0 %210
    %v212 = vperm.slane %v186, 1
    %v213 = vlaneseq
    %v214 = vshrl.u32 %v213, 7
    %216 = vset.pattern.permute.xlu0 %v214
    %217 = vperm.xlu0 %216, %v212
    %v218 = vpop.permute.xlu0 %217
    %v219 = vlaneseq
    %v220 = vshrl.u32 %v219, 7
    %v221 = vadd.s32 %v220, 8
    %222 = vset.pattern.permute.xlu0 %v221
    %223 = vperm.xlu0 %222, %v212
    %v224 = vpop.permute.xlu0 %223
    %v225 = vlaneseq
    %v226 = vshrl.u32 %v225, 7
    %v227 = vadd.s32 %v226, 16
    %228 = vset.pattern.permute.xlu0 %v227
    %229 = vperm.xlu0 %228, %v212
    %v230 = vpop.permute.xlu0 %229
    %v231 = vlaneseq
    %v232 = vshrl.u32 %v231, 7
    %v233 = vadd.s32 %v232, 24
    %234 = vset.pattern.permute.xlu0 %v233
    %235 = vperm.xlu0 %234, %v212
    %v236 = vpop.permute.xlu0 %235
    %v237 = vmul.f32 %v31, %v193
    %v238 = vmul.f32 %v32, %v193
    %v239 = vmul.f32 %v33, %v199
    %v240 = vmul.f32 %v34, %v199
    %v241 = vmul.f32 %v35, %v205
    %v242 = vmul.f32 %v36, %v205
    %v243 = vmul.f32 %v37, %v211
    %v244 = vmul.f32 %v38, %v211
    %v245 = vmul.f32 %v39, %v218
    %v246 = vmul.f32 %v40, %v218
    %v247 = vmul.f32 %v41, %v224
    %v248 = vmul.f32 %v42, %v224
    %v249 = vmul.f32 %v43, %v230
    %v250 = vmul.f32 %v44, %v230
    %v251 = vmul.f32 %v45, %v236
    %v252 = vmul.f32 %v46, %v236
    %253 = vst [vmem:[#allocation5] sm:$0xff] %v237
    %254 = vst [vmem:[#allocation5 + $0x8] sm:$0xff] %v238
    %255 = vst [vmem:[#allocation5 + $0x10] sm:$0xff] %v239
    %256 = vst [vmem:[#allocation5 + $0x18] sm:$0xff] %v240
    %257 = vst [vmem:[#allocation5 + $0x20] sm:$0xff] %v241
    %258 = vst [vmem:[#allocation5 + $0x28] sm:$0xff] %v242
    %259 = vst [vmem:[#allocation5 + $0x30] sm:$0xff] %v243
    %260 = vst [vmem:[#allocation5 + $0x38] sm:$0xff] %v244
    %261 = vst [vmem:[#allocation5 + $0x40] sm:$0xff] %v245
    %262 = vst [vmem:[#allocation5 + $0x48] sm:$0xff] %v246
    %263 = vst [vmem:[#allocation5 + $0x50] sm:$0xff] %v247
    %264 = vst [vmem:[#allocation5 + $0x58] sm:$0xff] %v248
    %265 = vst [vmem:[#allocation5 + $0x60] sm:$0xff] %v249
    %266 = vst [vmem:[#allocation5 + $0x68] sm:$0xff] %v250
    %267 = vst [vmem:[#allocation5 + $0x70] sm:$0xff] %v251
    %268 = vst [vmem:[#allocation5 + $0x78] sm:$0xff] %v252
    // Predicated region
    $region18: #{tpu_custom_call.1} parent=1 // pred_check
      _
    $region19: #{tpu_custom_call.1} parent=1 // pred_check_branch
      %270 = sbr.rel (0) target = $region21
    $region20: #{tpu_custom_call.1} parent=1 // pred_region
      %272 = vsyncadd [#allocation4], 0
      %s273 = sshll.u32 [#allocation5], 4
      %s274 = int_to_ptr.vmem [resolvable:$true] %s273
      %s275 = sshll.u32 %s3, 4
      %s276 = int_to_ptr.hbm [resolvable:$true] %s275
      %281 = dma.vmem_to_hbm [thread:$0]  %s274, 2048, %s276, [#allocation4], 256, 256, 16
    $region21: #{tpu_custom_call.1} parent=1 // pred_fallthru
      _
    // Predicated region
    $region22: #{tpu_custom_call.1} parent=1 // pred_check
      _
    $region23: #{tpu_custom_call.1} parent=1 // pred_check_branch
      %283 = sbr.rel (0) target = $region25
    $region24: #{tpu_custom_call.1} parent=1 // pred_region
      %285 = dma.done [#allocation4], 2048
    $region25: #{tpu_custom_call.1} parent=1 // pred_fallthru
      _
    %286 = vsyncpa [#allocation3], 1
    %287 = vsyncpa [#allocation4], 1

</llo_original>
